<compile_context>
chip_gen: v5e
topology: v5e:2x2
jax: 0.10.0
libtpu: 0.0.40
codegen_flags: <defaults>
</compile_context>

<pallas_src>
import functools

import jax
import jax.numpy as jnp
from jax.experimental import pallas as pl
from jax.experimental.pallas import tpu as pltpu


def _clip_embedding_kernel(ids_ref, pos_ref, emb_hbm, out_ref, buf, sem, *, seq_len):
    """One grid step = one full (T, E) sequence of the output.

    ids_ref : SMEM (B*T,) int32  -- scalar-prefetched, clamped token ids
    pos_ref : VMEM (T, E)        -- position-embedding table (resident, fetched once)
    emb_hbm : HBM  (V, E)        -- full embedding table, rows DMA'd manually
    out_ref : VMEM (T, E)        -- output block for sequence b (batch dim squeezed)
    buf     : VMEM (T, E)        -- gathered rows
    sem     : scalar DMA semaphore shared by all row copies
    """
    b = pl.program_id(0)
    base = b * seq_len

    # Read all token ids for this sequence once (trace-time list of scalars).
    rows = [ids_ref[base + r] for r in range(seq_len)]

    # Issue every row-gather DMA up front: seq_len small (~E*4 B) copies in
    # flight at once, all signaling the same semaphore (max DMA breadth).
    for r in range(seq_len):
        pltpu.make_async_copy(
            emb_hbm.at[pl.ds(rows[r], 1), :],   # (1, E) row in HBM
            buf.at[pl.ds(r, 1), :],             # (1, E) row in VMEM
            sem,
        ).start()

    # Wait for all of them. Each wait descriptor is identical to its start
    # descriptor, so per-wait byte counts exactly match the signaled amounts.
    for r in range(seq_len):
        pltpu.make_async_copy(
            emb_hbm.at[pl.ds(rows[r], 1), :],
            buf.at[pl.ds(r, 1), :],
            sem,
        ).wait()

    # x = token_embedding(tokens); x += position_embedding  (lane-dense E-last)
    out_ref[...] = (buf[...] + pos_ref[...]).astype(out_ref.dtype)


def clip_embedding(tokens, token_embedding, position_embedding):
    B, T = tokens.shape
    V, E = token_embedding.shape
    assert position_embedding.shape == (T, E)
    assert E % 128 == 0, "embedding dim must be lane-aligned"

    # PyTorch passes int64 ids; int32 is plenty for CLIP's vocab. Clamp so an
    # out-of-range id can never gather an arbitrary/OOB table row (differs from
    # nn.Embedding, which would raise on OOB ids).
    ids = jnp.clip(tokens.astype(jnp.int32), 0, V - 1).reshape(B * T)

    kernel = functools.partial(_clip_embedding_kernel, seq_len=T)

    dt_bytes = jnp.dtype(token_embedding.dtype).itemsize
    cost = pl.CostEstimate(
        flops=B * T * E,
        transcendentals=0,
        bytes_accessed=(2 * B * T * E + T * E) * dt_bytes,
    )

    return pl.pallas_call(
        kernel,
        out_shape=jax.ShapeDtypeStruct((B, T, E), token_embedding.dtype),
        grid_spec=pltpu.PrefetchScalarGridSpec(
            num_scalar_prefetch=1,                        # ids -> SMEM
            grid=(B,),
            in_specs=[
                # position table: constant block index -> VMEM-resident
                pl.BlockSpec((T, E), lambda b, ids: (0, 0)),
                # embedding table stays in HBM; rows gathered via manual DMA
                pl.BlockSpec(memory_space=pl.ANY),
            ],
            # leading batch dim squeezed: kernel sees a (T, E) output block
            out_specs=pl.BlockSpec((None, T, E), lambda b, ids: (b, 0, 0)),
            scratch_shapes=[
                pltpu.VMEM((T, E), token_embedding.dtype),
                pltpu.SemaphoreType.DMA(()),
            ],
        ),
        compiler_params=pltpu.CompilerParams(
            # Steps are independent -> megacore split across v7x's two TCs.
            dimension_semantics=("parallel",),
        ),
        cost_estimate=cost,
    )(ids, position_embedding, token_embedding)


if __name__ == "__main__":
    # Small shapes consistent with CLIPEmbedding(49408, 768, 77), scaled down:
    # T=13 deliberately not a multiple of 8 (like 77), E=128 so stores are
    # lane-dense.
    B, T, V, E = 2, 13, 512, 128

    key = jax.random.PRNGKey(0)
    k_tok, k_emb, k_pos = jax.random.split(key, 3)

    tokens = jax.random.randint(k_tok, (B, T), 0, V, dtype=jnp.int32)
    # nn.Embedding weight (random init) and the position parameter (small
    # perturbation of its zero init so the add path is exercised).
    token_embedding = 0.02 * jax.random.normal(k_emb, (V, E), dtype=jnp.float32)
    position_embedding = 0.01 * jax.random.normal(k_pos, (T, E), dtype=jnp.float32)

    out = jax.block_until_ready(
        clip_embedding(tokens, token_embedding, position_embedding)
    )

    # Pure-JAX reference: x = emb[tokens]; x += pos
    ref = token_embedding[tokens] + position_embedding[None, :, :]
    assert out.shape == (B, T, E) and out.dtype == jnp.float32
    assert jnp.allclose(out, ref, atol=1e-6, rtol=1e-6), "mismatch vs reference"

    print("KERNEL_OK")
</pallas_src>

<mosaic_0001>
module attributes {stable_mosaic.version = 11 : i64} {
  func.func @_clip_embedding_kernel(%arg0: i32, %arg1: memref<26xi32, #tpu.memory_space<smem>>, %arg2: memref<13x128xf32, #tpu.memory_space<vmem>>, %arg3: memref<512x128xf32, #tpu.memory_space<any>>, %arg4: memref<1x13x128xf32, #tpu.memory_space<vmem>>, %arg5: memref<13x128xf32, #tpu.memory_space<vmem>>, %arg6: memref<!tpu.dma_semaphore, #tpu.memory_space<semaphore_mem>>) attributes {dimension_semantics = [#tpu.dimension_semantics<parallel>], iteration_bounds = array<i64: 2>, scalar_prefetch = 1 : i64, scratch_operands = 2 : i64, tpu.core_type = #tpu.core_type<tc>, window_params = [{pipeline_mode = #tpu.pipeline_mode<synchronous>, transform_indices = @transform_0, window_bounds = array<i64: 13, 128>}, {}, {transform_indices = @transform_2, window_bounds = array<i64: 1, 13, 128>}]} {
    %c13_i32 = arith.constant 13 : i32
    %0 = arith.muli %arg0, %c13_i32 : i32
    %c0_i32 = arith.constant 0 : i32
    %1 = arith.addi %0, %c0_i32 : i32
    %2 = arith.index_cast %1 : i32 to index
    %3 = memref.load %arg1[%2] : memref<26xi32, #tpu.memory_space<smem>>
    %c1_i32 = arith.constant 1 : i32
    %4 = arith.addi %0, %c1_i32 : i32
    %5 = arith.index_cast %4 : i32 to index
    %6 = memref.load %arg1[%5] : memref<26xi32, #tpu.memory_space<smem>>
    %c2_i32 = arith.constant 2 : i32
    %7 = arith.addi %0, %c2_i32 : i32
    %8 = arith.index_cast %7 : i32 to index
    %9 = memref.load %arg1[%8] : memref<26xi32, #tpu.memory_space<smem>>
    %c3_i32 = arith.constant 3 : i32
    %10 = arith.addi %0, %c3_i32 : i32
    %11 = arith.index_cast %10 : i32 to index
    %12 = memref.load %arg1[%11] : memref<26xi32, #tpu.memory_space<smem>>
    %c4_i32 = arith.constant 4 : i32
    %13 = arith.addi %0, %c4_i32 : i32
    %14 = arith.index_cast %13 : i32 to index
    %15 = memref.load %arg1[%14] : memref<26xi32, #tpu.memory_space<smem>>
    %c5_i32 = arith.constant 5 : i32
    %16 = arith.addi %0, %c5_i32 : i32
    %17 = arith.index_cast %16 : i32 to index
    %18 = memref.load %arg1[%17] : memref<26xi32, #tpu.memory_space<smem>>
    %c6_i32 = arith.constant 6 : i32
    %19 = arith.addi %0, %c6_i32 : i32
    %20 = arith.index_cast %19 : i32 to index
    %21 = memref.load %arg1[%20] : memref<26xi32, #tpu.memory_space<smem>>
    %c7_i32 = arith.constant 7 : i32
    %22 = arith.addi %0, %c7_i32 : i32
    %23 = arith.index_cast %22 : i32 to index
    %24 = memref.load %arg1[%23] : memref<26xi32, #tpu.memory_space<smem>>
    %c8_i32 = arith.constant 8 : i32
    %25 = arith.addi %0, %c8_i32 : i32
    %26 = arith.index_cast %25 : i32 to index
    %27 = memref.load %arg1[%26] : memref<26xi32, #tpu.memory_space<smem>>
    %c9_i32 = arith.constant 9 : i32
    %28 = arith.addi %0, %c9_i32 : i32
    %29 = arith.index_cast %28 : i32 to index
    %30 = memref.load %arg1[%29] : memref<26xi32, #tpu.memory_space<smem>>
    %c10_i32 = arith.constant 10 : i32
    %31 = arith.addi %0, %c10_i32 : i32
    %32 = arith.index_cast %31 : i32 to index
    %33 = memref.load %arg1[%32] : memref<26xi32, #tpu.memory_space<smem>>
    %c11_i32 = arith.constant 11 : i32
    %34 = arith.addi %0, %c11_i32 : i32
    %35 = arith.index_cast %34 : i32 to index
    %36 = memref.load %arg1[%35] : memref<26xi32, #tpu.memory_space<smem>>
    %c12_i32 = arith.constant 12 : i32
    %37 = arith.addi %0, %c12_i32 : i32
    %38 = arith.index_cast %37 : i32 to index
    %39 = memref.load %arg1[%38] : memref<26xi32, #tpu.memory_space<smem>>
    %c0_i32_0 = arith.constant 0 : i32
    %40 = tpu.memref_slice %arg3[%3, %c0_i32_0] : memref<512x128xf32, #tpu.memory_space<any>> -> memref<1x128xf32, #tpu.memory_space<any>>
    %c0_i32_1 = arith.constant 0 : i32
    %c0_i32_2 = arith.constant 0 : i32
    %41 = tpu.memref_slice %arg5[%c0_i32_1, %c0_i32_2] : memref<13x128xf32, #tpu.memory_space<vmem>> -> memref<1x128xf32, #tpu.memory_space<vmem>>
    tpu.enqueue_dma source(%40 : memref<1x128xf32, #tpu.memory_space<any>>) target(%41 : memref<1x128xf32, #tpu.memory_space<vmem>>) target_semaphore(%arg6 : memref<!tpu.dma_semaphore, #tpu.memory_space<semaphore_mem>>)
    %c0_i32_3 = arith.constant 0 : i32
    %42 = tpu.memref_slice %arg3[%6, %c0_i32_3] : memref<512x128xf32, #tpu.memory_space<any>> -> memref<1x128xf32, #tpu.memory_space<any>>
    %c1_i32_4 = arith.constant 1 : i32
    %c0_i32_5 = arith.constant 0 : i32
    %43 = tpu.memref_slice %arg5[%c1_i32_4, %c0_i32_5] : memref<13x128xf32, #tpu.memory_space<vmem>> -> memref<1x128xf32, #tpu.memory_space<vmem>>
    tpu.enqueue_dma source(%42 : memref<1x128xf32, #tpu.memory_space<any>>) target(%43 : memref<1x128xf32, #tpu.memory_space<vmem>>) target_semaphore(%arg6 : memref<!tpu.dma_semaphore, #tpu.memory_space<semaphore_mem>>)
    %c0_i32_6 = arith.constant 0 : i32
    %44 = tpu.memref_slice %arg3[%9, %c0_i32_6] : memref<512x128xf32, #tpu.memory_space<any>> -> memref<1x128xf32, #tpu.memory_space<any>>
    %c2_i32_7 = arith.constant 2 : i32
    %c0_i32_8 = arith.constant 0 : i32
    %45 = tpu.memref_slice %arg5[%c2_i32_7, %c0_i32_8] : memref<13x128xf32, #tpu.memory_space<vmem>> -> memref<1x128xf32, #tpu.memory_space<vmem>>
    tpu.enqueue_dma source(%44 : memref<1x128xf32, #tpu.memory_space<any>>) target(%45 : memref<1x128xf32, #tpu.memory_space<vmem>>) target_semaphore(%arg6 : memref<!tpu.dma_semaphore, #tpu.memory_space<semaphore_mem>>)
    %c0_i32_9 = arith.constant 0 : i32
    %46 = tpu.memref_slice %arg3[%12, %c0_i32_9] : memref<512x128xf32, #tpu.memory_space<any>> -> memref<1x128xf32, #tpu.memory_space<any>>
    %c3_i32_10 = arith.constant 3 : i32
    %c0_i32_11 = arith.constant 0 : i32
    %47 = tpu.memref_slice %arg5[%c3_i32_10, %c0_i32_11] : memref<13x128xf32, #tpu.memory_space<vmem>> -> memref<1x128xf32, #tpu.memory_space<vmem>>
    tpu.enqueue_dma source(%46 : memref<1x128xf32, #tpu.memory_space<any>>) target(%47 : memref<1x128xf32, #tpu.memory_space<vmem>>) target_semaphore(%arg6 : memref<!tpu.dma_semaphore, #tpu.memory_space<semaphore_mem>>)
    %c0_i32_12 = arith.constant 0 : i32
    %48 = tpu.memref_slice %arg3[%15, %c0_i32_12] : memref<512x128xf32, #tpu.memory_space<any>> -> memref<1x128xf32, #tpu.memory_space<any>>
    %c4_i32_13 = arith.constant 4 : i32
    %c0_i32_14 = arith.constant 0 : i32
    %49 = tpu.memref_slice %arg5[%c4_i32_13, %c0_i32_14] : memref<13x128xf32, #tpu.memory_space<vmem>> -> memref<1x128xf32, #tpu.memory_space<vmem>>
    tpu.enqueue_dma source(%48 : memref<1x128xf32, #tpu.memory_space<any>>) target(%49 : memref<1x128xf32, #tpu.memory_space<vmem>>) target_semaphore(%arg6 : memref<!tpu.dma_semaphore, #tpu.memory_space<semaphore_mem>>)
    %c0_i32_15 = arith.constant 0 : i32
    %50 = tpu.memref_slice %arg3[%18, %c0_i32_15] : memref<512x128xf32, #tpu.memory_space<any>> -> memref<1x128xf32, #tpu.memory_space<any>>
    %c5_i32_16 = arith.constant 5 : i32
    %c0_i32_17 = arith.constant 0 : i32
    %51 = tpu.memref_slice %arg5[%c5_i32_16, %c0_i32_17] : memref<13x128xf32, #tpu.memory_space<vmem>> -> memref<1x128xf32, #tpu.memory_space<vmem>>
    tpu.enqueue_dma source(%50 : memref<1x128xf32, #tpu.memory_space<any>>) target(%51 : memref<1x128xf32, #tpu.memory_space<vmem>>) target_semaphore(%arg6 : memref<!tpu.dma_semaphore, #tpu.memory_space<semaphore_mem>>)
    %c0_i32_18 = arith.constant 0 : i32
    %52 = tpu.memref_slice %arg3[%21, %c0_i32_18] : memref<512x128xf32, #tpu.memory_space<any>> -> memref<1x128xf32, #tpu.memory_space<any>>
    %c6_i32_19 = arith.constant 6 : i32
    %c0_i32_20 = arith.constant 0 : i32
    %53 = tpu.memref_slice %arg5[%c6_i32_19, %c0_i32_20] : memref<13x128xf32, #tpu.memory_space<vmem>> -> memref<1x128xf32, #tpu.memory_space<vmem>>
    tpu.enqueue_dma source(%52 : memref<1x128xf32, #tpu.memory_space<any>>) target(%53 : memref<1x128xf32, #tpu.memory_space<vmem>>) target_semaphore(%arg6 : memref<!tpu.dma_semaphore, #tpu.memory_space<semaphore_mem>>)
    %c0_i32_21 = arith.constant 0 : i32
    %54 = tpu.memref_slice %arg3[%24, %c0_i32_21] : memref<512x128xf32, #tpu.memory_space<any>> -> memref<1x128xf32, #tpu.memory_space<any>>
    %c7_i32_22 = arith.constant 7 : i32
    %c0_i32_23 = arith.constant 0 : i32
    %55 = tpu.memref_slice %arg5[%c7_i32_22, %c0_i32_23] : memref<13x128xf32, #tpu.memory_space<vmem>> -> memref<1x128xf32, #tpu.memory_space<vmem>>
    tpu.enqueue_dma source(%54 : memref<1x128xf32, #tpu.memory_space<any>>) target(%55 : memref<1x128xf32, #tpu.memory_space<vmem>>) target_semaphore(%arg6 : memref<!tpu.dma_semaphore, #tpu.memory_space<semaphore_mem>>)
    %c0_i32_24 = arith.constant 0 : i32
    %56 = tpu.memref_slice %arg3[%27, %c0_i32_24] : memref<512x128xf32, #tpu.memory_space<any>> -> memref<1x128xf32, #tpu.memory_space<any>>
    %c8_i32_25 = arith.constant 8 : i32
    %c0_i32_26 = arith.constant 0 : i32
    %57 = tpu.memref_slice %arg5[%c8_i32_25, %c0_i32_26] : memref<13x128xf32, #tpu.memory_space<vmem>> -> memref<1x128xf32, #tpu.memory_space<vmem>>
    tpu.enqueue_dma source(%56 : memref<1x128xf32, #tpu.memory_space<any>>) target(%57 : memref<1x128xf32, #tpu.memory_space<vmem>>) target_semaphore(%arg6 : memref<!tpu.dma_semaphore, #tpu.memory_space<semaphore_mem>>)
    %c0_i32_27 = arith.constant 0 : i32
    %58 = tpu.memref_slice %arg3[%30, %c0_i32_27] : memref<512x128xf32, #tpu.memory_space<any>> -> memref<1x128xf32, #tpu.memory_space<any>>
    %c9_i32_28 = arith.constant 9 : i32
    %c0_i32_29 = arith.constant 0 : i32
    %59 = tpu.memref_slice %arg5[%c9_i32_28, %c0_i32_29] : memref<13x128xf32, #tpu.memory_space<vmem>> -> memref<1x128xf32, #tpu.memory_space<vmem>>
    tpu.enqueue_dma source(%58 : memref<1x128xf32, #tpu.memory_space<any>>) target(%59 : memref<1x128xf32, #tpu.memory_space<vmem>>) target_semaphore(%arg6 : memref<!tpu.dma_semaphore, #tpu.memory_space<semaphore_mem>>)
    %c0_i32_30 = arith.constant 0 : i32
    %60 = tpu.memref_slice %arg3[%33, %c0_i32_30] : memref<512x128xf32, #tpu.memory_space<any>> -> memref<1x128xf32, #tpu.memory_space<any>>
    %c10_i32_31 = arith.constant 10 : i32
    %c0_i32_32 = arith.constant 0 : i32
    %61 = tpu.memref_slice %arg5[%c10_i32_31, %c0_i32_32] : memref<13x128xf32, #tpu.memory_space<vmem>> -> memref<1x128xf32, #tpu.memory_space<vmem>>
    tpu.enqueue_dma source(%60 : memref<1x128xf32, #tpu.memory_space<any>>) target(%61 : memref<1x128xf32, #tpu.memory_space<vmem>>) target_semaphore(%arg6 : memref<!tpu.dma_semaphore, #tpu.memory_space<semaphore_mem>>)
    %c0_i32_33 = arith.constant 0 : i32
    %62 = tpu.memref_slice %arg3[%36, %c0_i32_33] : memref<512x128xf32, #tpu.memory_space<any>> -> memref<1x128xf32, #tpu.memory_space<any>>
    %c11_i32_34 = arith.constant 11 : i32
    %c0_i32_35 = arith.constant 0 : i32
    %63 = tpu.memref_slice %arg5[%c11_i32_34, %c0_i32_35] : memref<13x128xf32, #tpu.memory_space<vmem>> -> memref<1x128xf32, #tpu.memory_space<vmem>>
    tpu.enqueue_dma source(%62 : memref<1x128xf32, #tpu.memory_space<any>>) target(%63 : memref<1x128xf32, #tpu.memory_space<vmem>>) target_semaphore(%arg6 : memref<!tpu.dma_semaphore, #tpu.memory_space<semaphore_mem>>)
    %c0_i32_36 = arith.constant 0 : i32
    %64 = tpu.memref_slice %arg3[%39, %c0_i32_36] : memref<512x128xf32, #tpu.memory_space<any>> -> memref<1x128xf32, #tpu.memory_space<any>>
    %c12_i32_37 = arith.constant 12 : i32
    %c0_i32_38 = arith.constant 0 : i32
    %65 = tpu.memref_slice %arg5[%c12_i32_37, %c0_i32_38] : memref<13x128xf32, #tpu.memory_space<vmem>> -> memref<1x128xf32, #tpu.memory_space<vmem>>
    tpu.enqueue_dma source(%64 : memref<1x128xf32, #tpu.memory_space<any>>) target(%65 : memref<1x128xf32, #tpu.memory_space<vmem>>) target_semaphore(%arg6 : memref<!tpu.dma_semaphore, #tpu.memory_space<semaphore_mem>>)
    %c0_i32_39 = arith.constant 0 : i32
    %66 = tpu.memref_slice %arg3[%3, %c0_i32_39] : memref<512x128xf32, #tpu.memory_space<any>> -> memref<1x128xf32, #tpu.memory_space<any>>
    %c0_i32_40 = arith.constant 0 : i32
    %c0_i32_41 = arith.constant 0 : i32
    %67 = tpu.memref_slice %arg5[%c0_i32_40, %c0_i32_41] : memref<13x128xf32, #tpu.memory_space<vmem>> -> memref<1x128xf32, #tpu.memory_space<vmem>>
    tpu.wait_dma2 semaphore(%arg6 : memref<!tpu.dma_semaphore, #tpu.memory_space<semaphore_mem>>) src(%66 : memref<1x128xf32, #tpu.memory_space<any>>) dst(%67 : memref<1x128xf32, #tpu.memory_space<vmem>>)
    %c0_i32_42 = arith.constant 0 : i32
    %68 = tpu.memref_slice %arg3[%6, %c0_i32_42] : memref<512x128xf32, #tpu.memory_space<any>> -> memref<1x128xf32, #tpu.memory_space<any>>
    %c1_i32_43 = arith.constant 1 : i32
    %c0_i32_44 = arith.constant 0 : i32
    %69 = tpu.memref_slice %arg5[%c1_i32_43, %c0_i32_44] : memref<13x128xf32, #tpu.memory_space<vmem>> -> memref<1x128xf32, #tpu.memory_space<vmem>>
    tpu.wait_dma2 semaphore(%arg6 : memref<!tpu.dma_semaphore, #tpu.memory_space<semaphore_mem>>) src(%68 : memref<1x128xf32, #tpu.memory_space<any>>) dst(%69 : memref<1x128xf32, #tpu.memory_space<vmem>>)
    %c0_i32_45 = arith.constant 0 : i32
    %70 = tpu.memref_slice %arg3[%9, %c0_i32_45] : memref<512x128xf32, #tpu.memory_space<any>> -> memref<1x128xf32, #tpu.memory_space<any>>
    %c2_i32_46 = arith.constant 2 : i32
    %c0_i32_47 = arith.constant 0 : i32
    %71 = tpu.memref_slice %arg5[%c2_i32_46, %c0_i32_47] : memref<13x128xf32, #tpu.memory_space<vmem>> -> memref<1x128xf32, #tpu.memory_space<vmem>>
    tpu.wait_dma2 semaphore(%arg6 : memref<!tpu.dma_semaphore, #tpu.memory_space<semaphore_mem>>) src(%70 : memref<1x128xf32, #tpu.memory_space<any>>) dst(%71 : memref<1x128xf32, #tpu.memory_space<vmem>>)
    %c0_i32_48 = arith.constant 0 : i32
    %72 = tpu.memref_slice %arg3[%12, %c0_i32_48] : memref<512x128xf32, #tpu.memory_space<any>> -> memref<1x128xf32, #tpu.memory_space<any>>
    %c3_i32_49 = arith.constant 3 : i32
    %c0_i32_50 = arith.constant 0 : i32
    %73 = tpu.memref_slice %arg5[%c3_i32_49, %c0_i32_50] : memref<13x128xf32, #tpu.memory_space<vmem>> -> memref<1x128xf32, #tpu.memory_space<vmem>>
    tpu.wait_dma2 semaphore(%arg6 : memref<!tpu.dma_semaphore, #tpu.memory_space<semaphore_mem>>) src(%72 : memref<1x128xf32, #tpu.memory_space<any>>) dst(%73 : memref<1x128xf32, #tpu.memory_space<vmem>>)
    %c0_i32_51 = arith.constant 0 : i32
    %74 = tpu.memref_slice %arg3[%15, %c0_i32_51] : memref<512x128xf32, #tpu.memory_space<any>> -> memref<1x128xf32, #tpu.memory_space<any>>
    %c4_i32_52 = arith.constant 4 : i32
    %c0_i32_53 = arith.constant 0 : i32
    %75 = tpu.memref_slice %arg5[%c4_i32_52, %c0_i32_53] : memref<13x128xf32, #tpu.memory_space<vmem>> -> memref<1x128xf32, #tpu.memory_space<vmem>>
    tpu.wait_dma2 semaphore(%arg6 : memref<!tpu.dma_semaphore, #tpu.memory_space<semaphore_mem>>) src(%74 : memref<1x128xf32, #tpu.memory_space<any>>) dst(%75 : memref<1x128xf32, #tpu.memory_space<vmem>>)
    %c0_i32_54 = arith.constant 0 : i32
    %76 = tpu.memref_slice %arg3[%18, %c0_i32_54] : memref<512x128xf32, #tpu.memory_space<any>> -> memref<1x128xf32, #tpu.memory_space<any>>
    %c5_i32_55 = arith.constant 5 : i32
    %c0_i32_56 = arith.constant 0 : i32
    %77 = tpu.memref_slice %arg5[%c5_i32_55, %c0_i32_56] : memref<13x128xf32, #tpu.memory_space<vmem>> -> memref<1x128xf32, #tpu.memory_space<vmem>>
    tpu.wait_dma2 semaphore(%arg6 : memref<!tpu.dma_semaphore, #tpu.memory_space<semaphore_mem>>) src(%76 : memref<1x128xf32, #tpu.memory_space<any>>) dst(%77 : memref<1x128xf32, #tpu.memory_space<vmem>>)
    %c0_i32_57 = arith.constant 0 : i32
    %78 = tpu.memref_slice %arg3[%21, %c0_i32_57] : memref<512x128xf32, #tpu.memory_space<any>> -> memref<1x128xf32, #tpu.memory_space<any>>
    %c6_i32_58 = arith.constant 6 : i32
    %c0_i32_59 = arith.constant 0 : i32
    %79 = tpu.memref_slice %arg5[%c6_i32_58, %c0_i32_59] : memref<13x128xf32, #tpu.memory_space<vmem>> -> memref<1x128xf32, #tpu.memory_space<vmem>>
    tpu.wait_dma2 semaphore(%arg6 : memref<!tpu.dma_semaphore, #tpu.memory_space<semaphore_mem>>) src(%78 : memref<1x128xf32, #tpu.memory_space<any>>) dst(%79 : memref<1x128xf32, #tpu.memory_space<vmem>>)
    %c0_i32_60 = arith.constant 0 : i32
    %80 = tpu.memref_slice %arg3[%24, %c0_i32_60] : memref<512x128xf32, #tpu.memory_space<any>> -> memref<1x128xf32, #tpu.memory_space<any>>
    %c7_i32_61 = arith.constant 7 : i32
    %c0_i32_62 = arith.constant 0 : i32
    %81 = tpu.memref_slice %arg5[%c7_i32_61, %c0_i32_62] : memref<13x128xf32, #tpu.memory_space<vmem>> -> memref<1x128xf32, #tpu.memory_space<vmem>>
    tpu.wait_dma2 semaphore(%arg6 : memref<!tpu.dma_semaphore, #tpu.memory_space<semaphore_mem>>) src(%80 : memref<1x128xf32, #tpu.memory_space<any>>) dst(%81 : memref<1x128xf32, #tpu.memory_space<vmem>>)
    %c0_i32_63 = arith.constant 0 : i32
    %82 = tpu.memref_slice %arg3[%27, %c0_i32_63] : memref<512x128xf32, #tpu.memory_space<any>> -> memref<1x128xf32, #tpu.memory_space<any>>
    %c8_i32_64 = arith.constant 8 : i32
    %c0_i32_65 = arith.constant 0 : i32
    %83 = tpu.memref_slice %arg5[%c8_i32_64, %c0_i32_65] : memref<13x128xf32, #tpu.memory_space<vmem>> -> memref<1x128xf32, #tpu.memory_space<vmem>>
    tpu.wait_dma2 semaphore(%arg6 : memref<!tpu.dma_semaphore, #tpu.memory_space<semaphore_mem>>) src(%82 : memref<1x128xf32, #tpu.memory_space<any>>) dst(%83 : memref<1x128xf32, #tpu.memory_space<vmem>>)
    %c0_i32_66 = arith.constant 0 : i32
    %84 = tpu.memref_slice %arg3[%30, %c0_i32_66] : memref<512x128xf32, #tpu.memory_space<any>> -> memref<1x128xf32, #tpu.memory_space<any>>
    %c9_i32_67 = arith.constant 9 : i32
    %c0_i32_68 = arith.constant 0 : i32
    %85 = tpu.memref_slice %arg5[%c9_i32_67, %c0_i32_68] : memref<13x128xf32, #tpu.memory_space<vmem>> -> memref<1x128xf32, #tpu.memory_space<vmem>>
    tpu.wait_dma2 semaphore(%arg6 : memref<!tpu.dma_semaphore, #tpu.memory_space<semaphore_mem>>) src(%84 : memref<1x128xf32, #tpu.memory_space<any>>) dst(%85 : memref<1x128xf32, #tpu.memory_space<vmem>>)
    %c0_i32_69 = arith.constant 0 : i32
    %86 = tpu.memref_slice %arg3[%33, %c0_i32_69] : memref<512x128xf32, #tpu.memory_space<any>> -> memref<1x128xf32, #tpu.memory_space<any>>
    %c10_i32_70 = arith.constant 10 : i32
    %c0_i32_71 = arith.constant 0 : i32
    %87 = tpu.memref_slice %arg5[%c10_i32_70, %c0_i32_71] : memref<13x128xf32, #tpu.memory_space<vmem>> -> memref<1x128xf32, #tpu.memory_space<vmem>>
    tpu.wait_dma2 semaphore(%arg6 : memref<!tpu.dma_semaphore, #tpu.memory_space<semaphore_mem>>) src(%86 : memref<1x128xf32, #tpu.memory_space<any>>) dst(%87 : memref<1x128xf32, #tpu.memory_space<vmem>>)
    %c0_i32_72 = arith.constant 0 : i32
    %88 = tpu.memref_slice %arg3[%36, %c0_i32_72] : memref<512x128xf32, #tpu.memory_space<any>> -> memref<1x128xf32, #tpu.memory_space<any>>
    %c11_i32_73 = arith.constant 11 : i32
    %c0_i32_74 = arith.constant 0 : i32
    %89 = tpu.memref_slice %arg5[%c11_i32_73, %c0_i32_74] : memref<13x128xf32, #tpu.memory_space<vmem>> -> memref<1x128xf32, #tpu.memory_space<vmem>>
    tpu.wait_dma2 semaphore(%arg6 : memref<!tpu.dma_semaphore, #tpu.memory_space<semaphore_mem>>) src(%88 : memref<1x128xf32, #tpu.memory_space<any>>) dst(%89 : memref<1x128xf32, #tpu.memory_space<vmem>>)
    %c0_i32_75 = arith.constant 0 : i32
    %90 = tpu.memref_slice %arg3[%39, %c0_i32_75] : memref<512x128xf32, #tpu.memory_space<any>> -> memref<1x128xf32, #tpu.memory_space<any>>
    %c12_i32_76 = arith.constant 12 : i32
    %c0_i32_77 = arith.constant 0 : i32
    %91 = tpu.memref_slice %arg5[%c12_i32_76, %c0_i32_77] : memref<13x128xf32, #tpu.memory_space<vmem>> -> memref<1x128xf32, #tpu.memory_space<vmem>>
    tpu.wait_dma2 semaphore(%arg6 : memref<!tpu.dma_semaphore, #tpu.memory_space<semaphore_mem>>) src(%90 : memref<1x128xf32, #tpu.memory_space<any>>) dst(%91 : memref<1x128xf32, #tpu.memory_space<vmem>>)
    %c0 = arith.constant 0 : index
    %c0_78 = arith.constant 0 : index
    %92 = vector.load %arg5[%c0, %c0_78] : memref<13x128xf32, #tpu.memory_space<vmem>>, vector<13x128xf32>
    %c0_79 = arith.constant 0 : index
    %c0_80 = arith.constant 0 : index
    %93 = vector.load %arg2[%c0_79, %c0_80] : memref<13x128xf32, #tpu.memory_space<vmem>>, vector<13x128xf32>
    %94 = arith.addf %92, %93 : vector<13x128xf32>
    %c0_81 = arith.constant 0 : index
    %c0_82 = arith.constant 0 : index
    %c0_83 = arith.constant 0 : index
    %95 = vector.load %arg4[%c0_81, %c0_82, %c0_83] : memref<1x13x128xf32, #tpu.memory_space<vmem>>, vector<1x13x128xf32>
    %96 = vector.shape_cast %95 : vector<1x13x128xf32> to vector<13x128xf32>
    %97 = vector.shape_cast %94 : vector<13x128xf32> to vector<1x13x128xf32>
    tpu.vector_store %arg4[%c0_81, %c0_82, %c0_83], %97 {strides = array<i32>} : memref<1x13x128xf32, #tpu.memory_space<vmem>>, vector<1x13x128xf32>,
    return
  }
  func.func @transform_0(%arg0: i32, %arg1: memref<26xi32, #tpu.memory_space<smem>>) -> (i32, i32) {
    %c0_i32 = arith.constant 0 : i32
    %c0_i32_0 = arith.constant 0 : i32
    %c0_i32_1 = arith.constant 0 : i32
    return %c0_i32, %c0_i32_0 : i32, i32
  }
  func.func @transform_2(%arg0: i32, %arg1: memref<26xi32, #tpu.memory_space<smem>>) -> (i32, i32, i32) {
    %c0_i32 = arith.constant 0 : i32
    %c0_i32_0 = arith.constant 0 : i32
    %c0_i32_1 = arith.constant 0 : i32
    return %arg0, %c0_i32, %c0_i32_0 : i32, i32, i32
  }
}

</mosaic_0001>

<llo_original>
// kernel: tpu_custom_call.1
$region0: #{tpu_custom_call.1}
  #allocation0 [shape = 'u32[]', space=smem, size = 0x4, offset = 0x4, fixed_abs, tag = 'smem constant byte address 0x4 - core index']
  #allocation1 [shape = 'u32[72,128]{1,0:T(1,128)}', space=vmem, size = 0x9000, scoped, tag = 'internal scratch']
  #allocation2 [shape = 'f32[13,128]{1,0:T(8,128)}', space=vmem, size = 0x2000, scoped, tag = 'scratch operand']
  #allocation3 [shape = 's32[1]{0}', space=sflag, size = 0x4, scoped, tag = 'scratch operand']
  #allocation4 [shape = 's32[1]{0}', space=sflag, size = 0x4, scoped, tag = 'scoped memory for tpu_custom_call.1']
  #allocation5 [shape = 'u8[512]{0}', space=smem, size = 0x200, scoped, tag = 'prefetched SMEM operand 0']
  #allocation8 [shape = 's32[]', space=sflag, size = 0x4, offset = 0, fixed_abs, tag = 'sflag constant byte address 0x0 - dummy sync flag']
  #allocation9 [shape = 's32[]', space=sflag, size = 0x4, offset = 0, fixed_abs, tag = 'sflag constant byte address 0x0 - dummy sync flag']
  #allocation10 [shape = 'u32[]', space=smem, size = 0x4, offset = 0x44, fixed_abs, tag = 'smem constant byte address 0x44 - assertion arg 0']
  #allocation11 [shape = 'u32[]', space=smem, size = 0x4, offset = 0x48, fixed_abs, tag = 'smem constant byte address 0x48 - assertion arg 1']
  #allocation12 [shape = 's32[]', space=sflag, size = 0x4, offset = 0, fixed_abs, tag = 'sflag constant byte address 0x0 - dummy sync flag']
  #allocation13 [shape = 's32[]', space=sflag, size = 0x4, offset = 0, fixed_abs, tag = 'sflag constant byte address 0x0 - dummy sync flag']
  #allocation14 [shape = 's32[]', space=sflag, size = 0x4, offset = 0, fixed_abs, tag = 'sflag constant byte address 0x0 - dummy sync flag']
  #allocation15 [shape = 's32[]', space=sflag, size = 0x4, offset = 0, fixed_abs, tag = 'sflag constant byte address 0x0 - dummy sync flag']
  #allocation16 [shape = 's32[]', space=sflag, size = 0x4, offset = 0, fixed_abs, tag = 'sflag constant byte address 0x0 - dummy sync flag']
  #allocation17 [shape = 's32[]', space=sflag, size = 0x4, offset = 0, fixed_abs, tag = 'sflag constant byte address 0x0 - dummy sync flag']
  #allocation18 [shape = 's32[]', space=sflag, size = 0x4, offset = 0, fixed_abs, tag = 'sflag constant byte address 0x0 - dummy sync flag']
  #allocation19 [shape = 's32[]', space=sflag, size = 0x4, offset = 0, fixed_abs, tag = 'sflag constant byte address 0x0 - dummy sync flag']
  #allocation20 [shape = 's32[]', space=sflag, size = 0x4, offset = 0, fixed_abs, tag = 'sflag constant byte address 0x0 - dummy sync flag']
  #allocation21 [shape = 's32[]', space=sflag, size = 0x4, offset = 0, fixed_abs, tag = 'sflag constant byte address 0x0 - dummy sync flag']
  #allocation22 [shape = 's32[]', space=sflag, size = 0x4, offset = 0, fixed_abs, tag = 'sflag constant byte address 0x0 - dummy sync flag']
  #allocation23 [shape = 's32[]', space=sflag, size = 0x4, offset = 0, fixed_abs, tag = 'sflag constant byte address 0x0 - dummy sync flag']
  #allocation24 [shape = 's32[]', space=sflag, size = 0x4, offset = 0, fixed_abs, tag = 'sflag constant byte address 0x0 - dummy sync flag']
  #allocation25 [shape = 's32[]', space=sflag, size = 0x4, offset = 0, fixed_abs, tag = 'sflag constant byte address 0x0 - dummy sync flag']
  #allocation26 [shape = 's32[]', space=sflag, size = 0x4, offset = 0, fixed_abs, tag = 'sflag constant byte address 0x0 - dummy sync flag']
  #allocation27 [shape = 's32[]', space=sflag, size = 0x4, offset = 0, fixed_abs, tag = 'sflag constant byte address 0x0 - dummy sync flag']
  #allocation28 [shape = 's32[]', space=sflag, size = 0x4, offset = 0, fixed_abs, tag = 'sflag constant byte address 0x0 - dummy sync flag']
  #allocation29 [shape = 's32[]', space=sflag, size = 0x4, offset = 0, fixed_abs, tag = 'sflag constant byte address 0x0 - dummy sync flag']
  #allocation30 [shape = 's32[]', space=sflag, size = 0x4, offset = 0, fixed_abs, tag = 'sflag constant byte address 0x0 - dummy sync flag']
  #allocation31 [shape = 's32[]', space=sflag, size = 0x4, offset = 0, fixed_abs, tag = 'sflag constant byte address 0x0 - dummy sync flag']
  #allocation32 [shape = 's32[]', space=sflag, size = 0x4, offset = 0, fixed_abs, tag = 'sflag constant byte address 0x0 - dummy sync flag']
  #allocation33 [shape = 's32[]', space=sflag, size = 0x4, offset = 0, fixed_abs, tag = 'sflag constant byte address 0x0 - dummy sync flag']
  #allocation34 [shape = 's32[]', space=sflag, size = 0x4, offset = 0, fixed_abs, tag = 'sflag constant byte address 0x0 - dummy sync flag']
  #allocation35 [shape = 's32[]', space=sflag, size = 0x4, offset = 0, fixed_abs, tag = 'sflag constant byte address 0x0 - dummy sync flag']
  %s0 = inlined_call_operand.hbm [shape: s32[26], index: 0, kind: input, shape index: {}]
  %s1 = inlined_call_operand.hbm [shape: f32[13,128], index: 1, kind: input, shape index: {}]
  %s2 = inlined_call_operand.hbm [shape: f32[512,128], index: 2, kind: input, shape index: {}]
  %s3 = inlined_call_operand.vmem [shape: f32[2,13,128], index: 3, kind: output, shape index: {}]
  %s4 = sld [smem:[#allocation0]]
  $region93: #{tpu_custom_call.1} parent=0
    _
  %s6 = ssub.s32 1, %s4
  %s7 = scalar_select 0, %s6, %s4
  %s9 = sshll.u32 %s0, 4
  %s10 = int_to_ptr.hbm [resolvable:$true] %s9
  %12 = dma.hbm_to_smem %s10, 16, [#allocation5], [#allocation4]
  %14 = dma.done [#allocation4], 16
  %15 = sfence
  $region1: #{tpu_custom_call.1} parent=0
    #allocation6 [shape = 'u8[8192]{0}', space=vmem, size = 0x2000, scoped, tag = 'input window, operand 1, single buffered']
    #allocation7 [shape = 's32[2]{0}', space=sflag, size = 0x8, scoped, tag = 'scoped memory for tpu_custom_call.1']
    %16 = vsyncpa [#allocation7], 0
    loop: start=0, step=1, limit=4
    $region2: #{tpu_custom_call.1} parent=1 // loop_pre_header
      _
    $region3: #{tpu_custom_call.1} parent=1 // loop_header
      %s18 = sphi 0, %s22
      %p19 = scmp.ge.s32.totalorder %s18, 4
      %s26 = sphi 0, %s26
      %s28 = sphi 0, %s26
      %s29 = sphi 0, %s28
      %s43 = sphi 0, %s29
      %s49 = sphi 0, %s51
      %s52 = sphi 0, %s49
      %s53 = sphi 0, %s52
      %s69 = sphi 0, %s53
    $region4: #{tpu_custom_call.1} parent=1 // loop_header_branch
      %21 = sbr.rel (%p19) target = $region8
    $region5: #{tpu_custom_call.1} parent=1 // loop_body
      %s23 = ssub.s32 %s18, 1
      %s24 = ssub.s32 %s18, 2
      %s25 = sadd.s32 %s18, 1
      %s27 = sadd.s32 %s26, 1
      %p30 = scmp.eq.s32.totalorder %s18, 1
      %p31 = scmp.ne.s32.totalorder %s26, %s28
      %p32 = scmp.eq.s32.totalorder %s18, 0
      %p33 = por %p31, %p32
      %p34 = scmp.ne.s32.totalorder %s26, %s28
      %p35 = scmp.eq.s32.totalorder %s23, 1
      %p36 = por %p34, %p35
      %p37 = scmp.ne.s32.totalorder %s28, %s29
      %p38 = scmp.eq.s32.totalorder %s23, 0
      %p39 = por %p37, %p38
      %p40 = scmp.ne.s32.totalorder %s28, %s29
      %p41 = scmp.eq.s32.totalorder %s24, 1
      %p42 = por %p40, %p41
      %p44 = scmp.ne.s32.totalorder %s29, %s43
      %p45 = scmp.eq.s32.totalorder %s24, 0
      %p46 = por %p44, %p45
      %s47 = ssub.s32 %s18, %s25
      %p48 = scmp.eq.s32.totalorder %s47, 0
      %s50 = sadd.s32 %s49, 1
      %s51 = scalar_select %p48, %s49, %s50
      %p54 = pneg %p48
      %p55 = scmp.eq.s32.totalorder %s18, 1
      %p56 = por %p54, %p55
      %p57 = scmp.ne.s32.totalorder %s49, %s52
      %p58 = scmp.eq.s32.totalorder %s18, 0
      %p59 = por %p57, %p58
      %p60 = scmp.ne.s32.totalorder %s49, %s52
      %p61 = scmp.eq.s32.totalorder %s23, 1
      %p62 = por %p60, %p61
      %p63 = scmp.ne.s32.totalorder %s52, %s53
      %p64 = scmp.eq.s32.totalorder %s23, 0
      %p65 = por %p63, %p64
      %p66 = scmp.ne.s32.totalorder %s52, %s53
      %p67 = scmp.eq.s32.totalorder %s24, 1
      %p68 = por %p66, %p67
      %p70 = scmp.ne.s32.totalorder %s53, %s69
      %p71 = scmp.eq.s32.totalorder %s24, 0
      %p72 = por %p70, %p71
      %p73 = scmp.le.s32.totalorder 1, %s18
      %p74 = scmp.lt.s32.totalorder %s18, 3
      %p75 = pnand %p73, %p74
      %p76 = pneg %p75
      // Predicated region
      $region9: #{tpu_custom_call.1} parent=5 // pred_check
        _
      $region10: #{tpu_custom_call.1} parent=5 // pred_check_branch
        %78 = sbr.rel (%p75) target = $region12
      $region11: #{tpu_custom_call.1} parent=5 // pred_region
        %s79 = ssub.s32 %s18, 1
        // Predicated region
        $region13: #{tpu_custom_call.1} parent=11 // pred_check
          %p80 = pneg %p39
        $region14: #{tpu_custom_call.1} parent=11 // pred_check_branch
          %82 = sbr.rel (%p80) target = $region16
        $region15: #{tpu_custom_call.1} parent=11 // pred_region
          %84 = vsyncadd [#allocation7], 0
          %s85 = sshll.u32 %s1, 4
          %s86 = int_to_ptr.hbm [resolvable:$true] %s85
          %s87 = sshll.u32 [#allocation6], 4
          %s88 = int_to_ptr.vmem [resolvable:$true] %s87
          %93 = dma.hbm_to_vmem [thread:$0]  %s86, 256, %s88, [#allocation7], 128, 128, 8
        $region16: #{tpu_custom_call.1} parent=11 // pred_fallthru
          _
      $region12: #{tpu_custom_call.1} parent=5 // pred_fallthru
        _
      %p94 = scmp.lt.s32.totalorder %s18, 2
      // Predicated region
      $region17: #{tpu_custom_call.1} parent=5 // pred_check
        %p95 = pneg %p94
      $region18: #{tpu_custom_call.1} parent=5 // pred_check_branch
        %97 = sbr.rel (%p95) target = $region20
      $region19: #{tpu_custom_call.1} parent=5 // pred_region
        _
      $region20: #{tpu_custom_call.1} parent=5 // pred_fallthru
        _
      %p98 = scmp.le.s32.totalorder 1, %s18
      %p99 = scmp.lt.s32.totalorder %s18, 3
      %p100 = pnand %p98, %p99
      %p101 = pneg %p100
      // Predicated region
      $region21: #{tpu_custom_call.1} parent=5 // pred_check
        _
      $region22: #{tpu_custom_call.1} parent=5 // pred_check_branch
        %103 = sbr.rel (%p100) target = $region24
      $region23: #{tpu_custom_call.1} parent=5 // pred_region
        %s104 = ssub.s32 %s18, 1
        // Predicated region
        $region25: #{tpu_custom_call.1} parent=23 // pred_check
          %p105 = pneg %p39
        $region26: #{tpu_custom_call.1} parent=23 // pred_check_branch
          %107 = sbr.rel (%p105) target = $region28
        $region27: #{tpu_custom_call.1} parent=23 // pred_region
          %109 = dma.done [#allocation7], 256
        $region28: #{tpu_custom_call.1} parent=23 // pred_fallthru
          _
        %p110 = pneg %p39
        %p111 = pneg %p36
        %p112 = pneg %p65
        %p113 = pneg %p62
        %p114 = scmp.lt.s32.totalorder %s23, 1
        %s115 = scalar_select %p114, %s23, 1
        %s116 = smul.addr %s115, 2
        %s117 = smul.addr %s116, 8
        %s118 = scalar_lea.vmem %s3, %s117
        %p119 = scmp.lt.s32.totalorder %s23, 1
        %s120 = scalar_select %p119, %s23, 1
        %s121 = smul.addr %s120, 2
        %s122 = smul.addr %s121, 8
        %s123 = scalar_lea.vmem %s3, %s122
        %s124 = smul.u32 %s23, 13
        %s125 = sld [smem:[#allocation5 + %s124]]
        %s126 = sadd.s32 %s124, 1
        %s127 = sld [smem:[#allocation5 + %s126]]
        %s128 = sadd.s32 %s124, 2
        %s129 = sld [smem:[#allocation5 + %s128]]
        %s130 = sadd.s32 %s124, 3
        %s131 = sld [smem:[#allocation5 + %s130]]
        %s132 = sadd.s32 %s124, 4
        %s133 = sld [smem:[#allocation5 + %s132]]
        %s134 = sadd.s32 %s124, 5
        %s135 = sld [smem:[#allocation5 + %s134]]
        %s136 = sadd.s32 %s124, 6
        %s137 = sld [smem:[#allocation5 + %s136]]
        %s138 = sadd.s32 %s124, 7
        %s139 = sld [smem:[#allocation5 + %s138]]
        %s140 = sadd.s32 %s124, 8
        %s141 = sld [smem:[#allocation5 + %s140]]
        %s142 = sadd.s32 %s124, 9
        %s143 = sld [smem:[#allocation5 + %s142]]
        %s144 = sadd.s32 %s124, 10
        %s145 = sld [smem:[#allocation5 + %s144]]
        %s146 = sadd.s32 %s124, 11
        %s147 = sld [smem:[#allocation5 + %s146]]
        %s148 = sadd.s32 %s124, 12
        %s149 = sld [smem:[#allocation5 + %s148]]
        %s150 = scalar_lea.hbm %s2, %s125
        // Predicated region
        $region29: #{tpu_custom_call.1} parent=23 // pred_check
          _
        $region30: #{tpu_custom_call.1} parent=23 // pred_check_branch
          %152 = sbr.rel target = $region32
        $region31: #{tpu_custom_call.1} parent=23 // pred_region
          %153 = sst [smem:[#allocation10]] [#allocation9]
          %154 = sst [smem:[#allocation11]] [#allocation8]
        $region32: #{tpu_custom_call.1} parent=23 // pred_fallthru
          _
        %156 = shalt.err (0)
        %s158 = sshll.u32 %s150, 4
        %s159 = int_to_ptr.hbm [resolvable:$true] %s158
        %s160 = sshll.u32 [#allocation2], 4
        %s161 = int_to_ptr.vmem [resolvable:$true] %s160
        %163 = dma.hbm_to_vmem [thread:$0]  %s159, 16, %s161, [#allocation3]
        %s164 = scalar_lea.hbm %s2, %s127
        %s165 = scalar_lea.vmem [#allocation2], 1
        // Predicated region
        $region33: #{tpu_custom_call.1} parent=23 // pred_check
          _
        $region34: #{tpu_custom_call.1} parent=23 // pred_check_branch
          %167 = sbr.rel target = $region36
        $region35: #{tpu_custom_call.1} parent=23 // pred_region
          %168 = sst [smem:[#allocation10]] [#allocation13]
          %169 = sst [smem:[#allocation11]] [#allocation12]
        $region36: #{tpu_custom_call.1} parent=23 // pred_fallthru
          _
        %171 = shalt.err (0)
        %s173 = sshll.u32 %s164, 4
        %s174 = int_to_ptr.hbm [resolvable:$true] %s173
        %s175 = sshll.u32 %s165, 4
        %s176 = int_to_ptr.vmem [resolvable:$true] %s175
        %178 = dma.hbm_to_vmem [thread:$0]  %s174, 16, %s176, [#allocation3]
        %s179 = scalar_lea.hbm %s2, %s129
        %s180 = scalar_lea.vmem [#allocation2], 2
        // Predicated region
        $region37: #{tpu_custom_call.1} parent=23 // pred_check
          _
        $region38: #{tpu_custom_call.1} parent=23 // pred_check_branch
          %182 = sbr.rel target = $region40
        $region39: #{tpu_custom_call.1} parent=23 // pred_region
          %183 = sst [smem:[#allocation10]] [#allocation15]
          %184 = sst [smem:[#allocation11]] [#allocation14]
        $region40: #{tpu_custom_call.1} parent=23 // pred_fallthru
          _
        %186 = shalt.err (0)
        %s188 = sshll.u32 %s179, 4
        %s189 = int_to_ptr.hbm [resolvable:$true] %s188
        %s190 = sshll.u32 %s180, 4
        %s191 = int_to_ptr.vmem [resolvable:$true] %s190
        %193 = dma.hbm_to_vmem [thread:$0]  %s189, 16, %s191, [#allocation3]
        %s194 = scalar_lea.hbm %s2, %s131
        %s195 = scalar_lea.vmem [#allocation2], 3
        // Predicated region
        $region41: #{tpu_custom_call.1} parent=23 // pred_check
          _
        $region42: #{tpu_custom_call.1} parent=23 // pred_check_branch
          %197 = sbr.rel target = $region44
        $region43: #{tpu_custom_call.1} parent=23 // pred_region
          %198 = sst [smem:[#allocation10]] [#allocation17]
          %199 = sst [smem:[#allocation11]] [#allocation16]
        $region44: #{tpu_custom_call.1} parent=23 // pred_fallthru
          _
        %201 = shalt.err (0)
        %s203 = sshll.u32 %s194, 4
        %s204 = int_to_ptr.hbm [resolvable:$true] %s203
        %s205 = sshll.u32 %s195, 4
        %s206 = int_to_ptr.vmem [resolvable:$true] %s205
        %208 = dma.hbm_to_vmem [thread:$0]  %s204, 16, %s206, [#allocation3]
        %s209 = scalar_lea.hbm %s2, %s133
        %s210 = scalar_lea.vmem [#allocation2], 4
        // Predicated region
        $region45: #{tpu_custom_call.1} parent=23 // pred_check
          _
        $region46: #{tpu_custom_call.1} parent=23 // pred_check_branch
          %212 = sbr.rel target = $region48
        $region47: #{tpu_custom_call.1} parent=23 // pred_region
          %213 = sst [smem:[#allocation10]] [#allocation19]
          %214 = sst [smem:[#allocation11]] [#allocation18]
        $region48: #{tpu_custom_call.1} parent=23 // pred_fallthru
          _
        %216 = shalt.err (0)
        %s218 = sshll.u32 %s209, 4
        %s219 = int_to_ptr.hbm [resolvable:$true] %s218
        %s220 = sshll.u32 %s210, 4
        %s221 = int_to_ptr.vmem [resolvable:$true] %s220
        %223 = dma.hbm_to_vmem [thread:$0]  %s219, 16, %s221, [#allocation3]
        %s224 = scalar_lea.hbm %s2, %s135
        %s225 = scalar_lea.vmem [#allocation2], 5
        // Predicated region
        $region49: #{tpu_custom_call.1} parent=23 // pred_check
          _
        $region50: #{tpu_custom_call.1} parent=23 // pred_check_branch
          %227 = sbr.rel target = $region52
        $region51: #{tpu_custom_call.1} parent=23 // pred_region
          %228 = sst [smem:[#allocation10]] [#allocation21]
          %229 = sst [smem:[#allocation11]] [#allocation20]
        $region52: #{tpu_custom_call.1} parent=23 // pred_fallthru
          _
        %231 = shalt.err (0)
        %s233 = sshll.u32 %s224, 4
        %s234 = int_to_ptr.hbm [resolvable:$true] %s233
        %s235 = sshll.u32 %s225, 4
        %s236 = int_to_ptr.vmem [resolvable:$true] %s235
        %238 = dma.hbm_to_vmem [thread:$0]  %s234, 16, %s236, [#allocation3]
        %s239 = scalar_lea.hbm %s2, %s137
        %s240 = scalar_lea.vmem [#allocation2], 6
        // Predicated region
        $region53: #{tpu_custom_call.1} parent=23 // pred_check
          _
        $region54: #{tpu_custom_call.1} parent=23 // pred_check_branch
          %242 = sbr.rel target = $region56
        $region55: #{tpu_custom_call.1} parent=23 // pred_region
          %243 = sst [smem:[#allocation10]] [#allocation23]
          %244 = sst [smem:[#allocation11]] [#allocation22]
        $region56: #{tpu_custom_call.1} parent=23 // pred_fallthru
          _
        %246 = shalt.err (0)
        %s248 = sshll.u32 %s239, 4
        %s249 = int_to_ptr.hbm [resolvable:$true] %s248
        %s250 = sshll.u32 %s240, 4
        %s251 = int_to_ptr.vmem [resolvable:$true] %s250
        %253 = dma.hbm_to_vmem [thread:$0]  %s249, 16, %s251, [#allocation3]
        %s254 = scalar_lea.hbm %s2, %s139
        %s255 = scalar_lea.vmem [#allocation2], 7
        // Predicated region
        $region57: #{tpu_custom_call.1} parent=23 // pred_check
          _
        $region58: #{tpu_custom_call.1} parent=23 // pred_check_branch
          %257 = sbr.rel target = $region60
        $region59: #{tpu_custom_call.1} parent=23 // pred_region
          %258 = sst [smem:[#allocation10]] [#allocation25]
          %259 = sst [smem:[#allocation11]] [#allocation24]
        $region60: #{tpu_custom_call.1} parent=23 // pred_fallthru
          _
        %261 = shalt.err (0)
        %s263 = sshll.u32 %s254, 4
        %s264 = int_to_ptr.hbm [resolvable:$true] %s263
        %s265 = sshll.u32 %s255, 4
        %s266 = int_to_ptr.vmem [resolvable:$true] %s265
        %268 = dma.hbm_to_vmem [thread:$0]  %s264, 16, %s266, [#allocation3]
        %s269 = scalar_lea.hbm %s2, %s141
        %s270 = scalar_lea.vmem [#allocation2], 8
        // Predicated region
        $region61: #{tpu_custom_call.1} parent=23 // pred_check
          _
        $region62: #{tpu_custom_call.1} parent=23 // pred_check_branch
          %272 = sbr.rel target = $region64
        $region63: #{tpu_custom_call.1} parent=23 // pred_region
          %273 = sst [smem:[#allocation10]] [#allocation27]
          %274 = sst [smem:[#allocation11]] [#allocation26]
        $region64: #{tpu_custom_call.1} parent=23 // pred_fallthru
          _
        %276 = shalt.err (0)
        %s278 = sshll.u32 %s269, 4
        %s279 = int_to_ptr.hbm [resolvable:$true] %s278
        %s280 = sshll.u32 %s270, 4
        %s281 = int_to_ptr.vmem [resolvable:$true] %s280
        %283 = dma.hbm_to_vmem [thread:$0]  %s279, 16, %s281, [#allocation3]
        %s284 = scalar_lea.hbm %s2, %s143
        %s285 = scalar_lea.vmem [#allocation2], 9
        // Predicated region
        $region65: #{tpu_custom_call.1} parent=23 // pred_check
          _
        $region66: #{tpu_custom_call.1} parent=23 // pred_check_branch
          %287 = sbr.rel target = $region68
        $region67: #{tpu_custom_call.1} parent=23 // pred_region
          %288 = sst [smem:[#allocation10]] [#allocation29]
          %289 = sst [smem:[#allocation11]] [#allocation28]
        $region68: #{tpu_custom_call.1} parent=23 // pred_fallthru
          _
        %291 = shalt.err (0)
        %s293 = sshll.u32 %s284, 4
        %s294 = int_to_ptr.hbm [resolvable:$true] %s293
        %s295 = sshll.u32 %s285, 4
        %s296 = int_to_ptr.vmem [resolvable:$true] %s295
        %298 = dma.hbm_to_vmem [thread:$0]  %s294, 16, %s296, [#allocation3]
        %s299 = scalar_lea.hbm %s2, %s145
        %s300 = scalar_lea.vmem [#allocation2], 10
        // Predicated region
        $region69: #{tpu_custom_call.1} parent=23 // pred_check
          _
        $region70: #{tpu_custom_call.1} parent=23 // pred_check_branch
          %302 = sbr.rel target = $region72
        $region71: #{tpu_custom_call.1} parent=23 // pred_region
          %303 = sst [smem:[#allocation10]] [#allocation31]
          %304 = sst [smem:[#allocation11]] [#allocation30]
        $region72: #{tpu_custom_call.1} parent=23 // pred_fallthru
          _
        %306 = shalt.err (0)
        %s308 = sshll.u32 %s299, 4
        %s309 = int_to_ptr.hbm [resolvable:$true] %s308
        %s310 = sshll.u32 %s300, 4
        %s311 = int_to_ptr.vmem [resolvable:$true] %s310
        %313 = dma.hbm_to_vmem [thread:$0]  %s309, 16, %s311, [#allocation3]
        %s314 = scalar_lea.hbm %s2, %s147
        %s315 = scalar_lea.vmem [#allocation2], 11
        // Predicated region
        $region73: #{tpu_custom_call.1} parent=23 // pred_check
          _
        $region74: #{tpu_custom_call.1} parent=23 // pred_check_branch
          %317 = sbr.rel target = $region76
        $region75: #{tpu_custom_call.1} parent=23 // pred_region
          %318 = sst [smem:[#allocation10]] [#allocation33]
          %319 = sst [smem:[#allocation11]] [#allocation32]
        $region76: #{tpu_custom_call.1} parent=23 // pred_fallthru
          _
        %321 = shalt.err (0)
        %s323 = sshll.u32 %s314, 4
        %s324 = int_to_ptr.hbm [resolvable:$true] %s323
        %s325 = sshll.u32 %s315, 4
        %s326 = int_to_ptr.vmem [resolvable:$true] %s325
        %328 = dma.hbm_to_vmem [thread:$0]  %s324, 16, %s326, [#allocation3]
        %s329 = scalar_lea.hbm %s2, %s149
        %s330 = scalar_lea.vmem [#allocation2], 12
        // Predicated region
        $region77: #{tpu_custom_call.1} parent=23 // pred_check
          _
        $region78: #{tpu_custom_call.1} parent=23 // pred_check_branch
          %332 = sbr.rel target = $region80
        $region79: #{tpu_custom_call.1} parent=23 // pred_region
          %333 = sst [smem:[#allocation10]] [#allocation35]
          %334 = sst [smem:[#allocation11]] [#allocation34]
        $region80: #{tpu_custom_call.1} parent=23 // pred_fallthru
          _
        %336 = shalt.err (0)
        %s338 = sshll.u32 %s329, 4
        %s339 = int_to_ptr.hbm [resolvable:$true] %s338
        %s340 = sshll.u32 %s330, 4
        %s341 = int_to_ptr.vmem [resolvable:$true] %s340
        %343 = dma.hbm_to_vmem [thread:$0]  %s339, 16, %s341, [#allocation3]
        %s344 = smul.u32 1, 1
        %s345 = sshll.u32 %s344, 4
        %346 = dma.done [#allocation3], %s345
        %s347 = sshll.u32 %s344, 4
        %348 = dma.done [#allocation3], %s347
        %s349 = sshll.u32 %s344, 4
        %350 = dma.done [#allocation3], %s349
        %s351 = sshll.u32 %s344, 4
        %352 = dma.done [#allocation3], %s351
        %s353 = sshll.u32 %s344, 4
        %354 = dma.done [#allocation3], %s353
        %s355 = sshll.u32 %s344, 4
        %356 = dma.done [#allocation3], %s355
        %s357 = sshll.u32 %s344, 4
        %358 = dma.done [#allocation3], %s357
        %s359 = sshll.u32 %s344, 4
        %360 = dma.done [#allocation3], %s359
        %s361 = sshll.u32 %s344, 4
        %362 = dma.done [#allocation3], %s361
        %s363 = sshll.u32 %s344, 4
        %364 = dma.done [#allocation3], %s363
        %s365 = sshll.u32 %s344, 4
        %366 = dma.done [#allocation3], %s365
        %s367 = sshll.u32 %s344, 4
        %368 = dma.done [#allocation3], %s367
        %s369 = sshll.u32 %s344, 4
        %370 = dma.done [#allocation3], %s369
        %v371 = vld [vmem:[#allocation2] sm:$0xff]
        %v372 = vld [vmem:[#allocation2 + $0x8] sm:$0x1f]
        %v373 = vld [vmem:[#allocation6] sm:$0xff]
        %v374 = vld [vmem:[#allocation6 + $0x8] sm:$0x1f]
        %v375 = vadd.f32 %v371, %v373
        %v376 = vadd.f32 %v372, %v374
        %377 = vst [vmem:[%s123] sm:$0xff] %v375
        %378 = vst [vmem:[%s123 + $0x8] sm:$0x1f] %v376
        %p379 = scmp.lt.s32.totalorder %s23, 1
        %s380 = scalar_select %p379, %s23, 1
        %s381 = smul.addr %s380, 2
        %s382 = smul.addr %s381, 8
        %s383 = scalar_lea.vmem %s3, %s382
        // Predicated region
        $region81: #{tpu_custom_call.1} parent=23 // pred_check
          %p384 = pneg %p62
        $region82: #{tpu_custom_call.1} parent=23 // pred_check_branch
          %386 = sbr.rel (%p384) target = $region84
        $region83: #{tpu_custom_call.1} parent=23 // pred_region
          _
        $region84: #{tpu_custom_call.1} parent=23 // pred_fallthru
          _
      $region24: #{tpu_custom_call.1} parent=5 // pred_fallthru
        _
      %p387 = scmp.le.s32.totalorder 2, %s18
      // Predicated region
      $region85: #{tpu_custom_call.1} parent=5 // pred_check
        %p388 = pneg %p387
      $region86: #{tpu_custom_call.1} parent=5 // pred_check_branch
        %390 = sbr.rel (%p388) target = $region88
      $region87: #{tpu_custom_call.1} parent=5 // pred_region
        %s391 = ssub.s32 %s18, 2
        // Predicated region
        $region89: #{tpu_custom_call.1} parent=87 // pred_check
          %p392 = pneg %p68
        $region90: #{tpu_custom_call.1} parent=87 // pred_check_branch
          %394 = sbr.rel (%p392) target = $region92
        $region91: #{tpu_custom_call.1} parent=87 // pred_region
          %p395 = scmp.lt.s32.totalorder %s24, 1
          %s396 = scalar_select %p395, %s24, 1
          %s397 = smul.addr %s396, 2
          %s398 = smul.addr %s397, 8
          %s399 = scalar_lea.vmem %s3, %s398
        $region92: #{tpu_custom_call.1} parent=87 // pred_fallthru
          _
      $region88: #{tpu_custom_call.1} parent=5 // pred_fallthru
        _
    $region6: #{tpu_custom_call.1} parent=1 // loop_footer
      %s22 = sadd.s32 1, %s18
    $region7: #{tpu_custom_call.1} parent=1 // loop_footer_branch
      %17 = sbr.rel target = $region3
    $region8: #{tpu_custom_call.1} parent=1 // loop_exit
      _
    %400 = vsyncpa [#allocation7], 1
    %s401 = scalar_lea.sflag [#allocation7], 1
    %402 = vsyncpa %s401, 1
  %403 = vsyncmov [#allocation3]
  %s404 = vpop.sfrf %403
  %p405 = scmp.eq.s32.totalorder %s404, 0
  %p406 = pneg %p405
  %408 = shalt.err (%p406)

</llo_original>
